<compile_context>
chip_gen: v6e
topology: v6e:2x2x1
jax: 0.10.0
libtpu: 0.0.40
codegen_flags: <defaults>
</compile_context>

<pallas_src>
import functools
import math

import jax
import jax.numpy as jnp
from jax.experimental import pallas as pl
from jax.experimental.pallas import tpu as pltpu


def _add_margin_kernel(x_ref, w_ref, lbl_ref, out_ref, *, s, m):
    """One (tile_b, tile_n) output tile of s * (normalize(x) @ normalize(w).T - m*onehot)."""
    eps2 = jnp.float32(1e-24)          # == (F.normalize eps 1e-12)^2, clamp on squared norm
    tile_n = out_ref.shape[1]

    x = x_ref[...]                      # (TILE_B, D) f32
    w = w_ref[...]                      # (TILE_N, D) f32

    # Raw (un-normalized) logits on the MXU: bf16 operands, f32 accumulation.
    # dim1.dim1 contraction -> MXU gets the weight tile as-is (no explicit transpose).
    raw = jax.lax.dot_general(
        x.astype(jnp.bfloat16), w.astype(jnp.bfloat16),
        dimension_numbers=(((1,), (1,)), ((), ())),
        preferred_element_type=jnp.float32)                               # (TILE_B, TILE_N)

    # Post-matmul normalization: rank-1 row/column scalings (EUP rsqrt + tiny VPU work)
    # instead of rescaling the full (TILE_N, D) / (TILE_B, D) operands every grid step.
    x_rs = jax.lax.rsqrt(jnp.maximum(jnp.sum(x * x, axis=-1, keepdims=True), eps2))  # (TILE_B,1)
    w_rs = jax.lax.rsqrt(jnp.maximum(jnp.sum(w * w, axis=-1, keepdims=True), eps2))  # (TILE_N,1)
    scos = raw * (jnp.float32(s) * x_rs) * jnp.reshape(w_rs, (1, tile_n))            # s*cosine

    # Additive margin on the label column. Compare the local lane iota against
    # (label - tile offset): no (TILE_B, TILE_N) index add. Padded rows use label=-1,
    # which never matches a non-negative column index (also covers label=None).
    col0 = pl.program_id(0) * tile_n
    col_ids = jax.lax.broadcasted_iota(jnp.int32, scos.shape, 1)
    is_target = col_ids == (lbl_ref[...] - col0)

    out_ref[...] = jnp.where(is_target, scos - jnp.float32(s * m), scos).astype(out_ref.dtype)


def _vmem_capacity_bytes():
    """Per-core VMEM capacity; conservative v7x fallback (64 MiB) if query unavailable."""
    try:
        info = pltpu.get_tpu_info()
        for attr in ("vmem_capacity_bytes", "vmem_size_bytes", "vmem_bytes"):
            cap = getattr(info, attr, None)
            if cap:
                return int(cap)
    except Exception:
        pass
    return 64 * 1024 * 1024


def _vmem_bytes(tile_b, tile_n, d_pad):
    """Estimate of the kernel's VMEM working set (double-buffered blocks + temporaries)."""
    f32, bf16, i32 = 4, 2, 4
    blocks = 2 * (tile_b * d_pad * f32            # x block
                  + tile_n * d_pad * f32          # weight block
                  + tile_b * tile_n * f32         # output block
                  + tile_b * 128 * i32)           # label block (lane-padded)
    temps = (tile_b * d_pad * bf16 + tile_n * d_pad * bf16   # bf16 MXU operands
             + tile_b * tile_n * f32                         # raw / scos tile
             + (tile_b + tile_n) * f32)                      # rsqrt vectors
    return blocks + temps


def add_margin_product(x, weight, label, s=30.0, m=0.4, *, tile_n=None, tile_b=None):
    """JAX wrapper: pads to TPU-friendly shapes, tiles over (N, B), slices the result."""
    B, D = x.shape
    N, Dw = weight.shape
    assert Dw == D

    d_pad = 128 * pl.cdiv(D, 128)            # lane-dense contraction dim (zero-padded)
    n128 = 128 * pl.cdiv(N, 128)

    vmem_cap = _vmem_capacity_bytes()
    budget = (vmem_cap * 5) // 8             # leave headroom below physical VMEM

    auto_b = tile_b is None
    auto_n = tile_n is None
    if auto_b:
        tile_b = min(16 * pl.cdiv(B, 16), 256)   # bf16 sublane packing; 256 MXU rows when large
    if auto_n:
        tile_n = min(n128, 8192)                 # big lane-dense weight tiles when VMEM allows
    assert tile_b % 16 == 0 and tile_n % 128 == 0

    # Budget-derived shrink (weight tile first, then batch tile).
    if auto_n:
        while tile_n > 128 and _vmem_bytes(tile_b, tile_n, d_pad) > budget:
            tile_n = max(128, 128 * ((tile_n // 128) // 2))
    if auto_b:
        while tile_b > 16 and _vmem_bytes(tile_b, tile_n, d_pad) > budget:
            tile_b = max(16, 16 * ((tile_b // 16) // 2))
    # v7x megacore: make sure there are >= 2 grid steps when N allows it.
    if auto_n and pl.cdiv(N, tile_n) * pl.cdiv(B, tile_b) < 2 and n128 >= 256:
        tile_n = 128 * pl.cdiv(n128 // 128, 2)

    n_pad = tile_n * pl.cdiv(N, tile_n)
    b_pad = tile_b * pl.cdiv(B, tile_b)

    x_p = x.astype(jnp.float32)
    if (b_pad, d_pad) != (B, D):
        x_p = jnp.pad(x_p, ((0, b_pad - B), (0, d_pad - D)))
    w_p = weight.astype(jnp.float32)
    if (n_pad, d_pad) != (N, D):
        w_p = jnp.pad(w_p, ((0, n_pad - N), (0, d_pad - D)))

    lbl = jnp.full((b_pad, 1), -1, dtype=jnp.int32)        # -1 => no margin (inference path)
    if label is not None:
        lbl = lbl.at[:B, 0].set(label.astype(jnp.int32))

    n_tiles = n_pad // tile_n
    b_tiles = b_pad // tile_b

    vmem_limit = int(min(max(_vmem_bytes(tile_b, tile_n, d_pad) + (4 << 20), 32 << 20),
                         (vmem_cap * 7) // 8))

    kernel = functools.partial(_add_margin_kernel, s=float(s), m=float(m))

    out = pl.pallas_call(
        kernel,
        out_shape=jax.ShapeDtypeStruct((b_pad, n_pad), jnp.float32),
        # N outer / B inner: the weight block index depends only on the outer axis, so it
        # is not re-DMA'd across the inner B loop (weight HBM traffic stays at its floor).
        grid=(n_tiles, b_tiles),
        in_specs=[
            pl.BlockSpec((tile_b, d_pad), lambda j, i: (i, 0)),   # x
            pl.BlockSpec((tile_n, d_pad), lambda j, i: (j, 0)),   # weight (streamed, double-buffered)
            pl.BlockSpec((tile_b, 1), lambda j, i: (i, 0)),       # label column
        ],
        out_specs=pl.BlockSpec((tile_b, tile_n), lambda j, i: (i, j)),
        compiler_params=pltpu.CompilerParams(
            dimension_semantics=("parallel", "parallel"),
            vmem_limit_bytes=vmem_limit,
        ),
    )(x_p, w_p, lbl)

    return out[:B, :N]


def _reference_f32(x, w, label, s, m):
    """PyTorch-equivalent pure-f32 reference."""
    xn = x / jnp.maximum(jnp.linalg.norm(x, axis=1, keepdims=True), 1e-12)
    wn = w / jnp.maximum(jnp.linalg.norm(w, axis=1, keepdims=True), 1e-12)
    cosine = xn @ wn.T
    if label is None:
        return cosine * s
    one_hot = jax.nn.one_hot(label, w.shape[0], dtype=jnp.float32)
    return (one_hot * (cosine - m) + (1.0 - one_hot) * cosine) * s


def _reference_bf16(x, w, label, s, m):
    """Same math with the kernel's quantization order (bf16 operands, post-matmul scaling)."""
    xq = x.astype(jnp.bfloat16).astype(jnp.float32)
    wq = w.astype(jnp.bfloat16).astype(jnp.float32)
    raw = xq @ wq.T
    x_rs = 1.0 / jnp.maximum(jnp.linalg.norm(x, axis=1, keepdims=True), 1e-12)
    w_rs = 1.0 / jnp.maximum(jnp.linalg.norm(w, axis=1, keepdims=True), 1e-12)
    scos = raw * (s * x_rs) * w_rs.T
    if label is None:
        return scos
    one_hot = jax.nn.one_hot(label, w.shape[0], dtype=jnp.float32)
    return scos - one_hot * (s * m)


def _xavier_uniform(key, out_features, in_features):
    limit = math.sqrt(6.0 / (in_features + out_features))
    return jax.random.uniform(key, (out_features, in_features), jnp.float32, -limit, limit)


if __name__ == "__main__":
    s, m = 30.0, 0.4
    key = jax.random.PRNGKey(0)

    # Case 1: small aligned shapes (single tile on each axis), train + eval paths.
    B, D, N = 8, 32, 128
    k1, k2, k3, key = jax.random.split(key, 4)
    x = jax.random.normal(k1, (B, D), dtype=jnp.float32)
    w = _xavier_uniform(k2, N, D)
    label = jax.random.randint(k3, (B,), 0, N, dtype=jnp.int32)

    out = jax.block_until_ready(add_margin_product(x, w, label, s=s, m=m))
    assert out.shape == (B, N)
    assert jnp.allclose(out, _reference_bf16(x, w, label, s, m), atol=5e-2)
    assert jnp.allclose(out, _reference_f32(x, w, label, s, m), atol=3e-1)  # bf16 MXU operands

    out_eval = jax.block_until_ready(add_margin_product(x, w, None, s=s, m=m))
    assert jnp.allclose(out_eval, _reference_bf16(x, w, None, s, m), atol=5e-2)

    # Case 2: non-aligned B / D / N with multiple N tiles — exercises the program_id
    # margin offset, D zero-padding, and the padding/slicing paths.
    B2, D2, N2 = 13, 72, 300
    k1, k2, k3, key = jax.random.split(key, 4)
    x2 = jax.random.normal(k1, (B2, D2), dtype=jnp.float32)
    w2 = _xavier_uniform(k2, N2, D2)
    label2 = jax.random.randint(k3, (B2,), 0, N2, dtype=jnp.int32)

    out2 = jax.block_until_ready(add_margin_product(x2, w2, label2, s=s, m=m, tile_n=128))
    assert out2.shape == (B2, N2)
    assert jnp.allclose(out2, _reference_bf16(x2, w2, label2, s, m), atol=5e-2)
    assert jnp.allclose(out2, _reference_f32(x2, w2, label2, s, m), atol=3e-1)

    # Case 3: 2-D grid (multiple B tiles x multiple N tiles) — exercises weight residency
    # across the inner B loop and the per-B-block label tiles.
    B3, D3, N3 = 40, 64, 260
    k1, k2, k3, key = jax.random.split(key, 4)
    x3 = jax.random.normal(k1, (B3, D3), dtype=jnp.float32)
    w3 = _xavier_uniform(k2, N3, D3)
    label3 = jax.random.randint(k3, (B3,), 0, N3, dtype=jnp.int32)

    out3 = jax.block_until_ready(
        add_margin_product(x3, w3, label3, s=s, m=m, tile_n=128, tile_b=16))
    assert out3.shape == (B3, N3)
    assert jnp.allclose(out3, _reference_bf16(x3, w3, label3, s, m), atol=5e-2)
    assert jnp.allclose(out3, _reference_f32(x3, w3, label3, s, m), atol=3e-1)

    print("KERNEL_OK")
</pallas_src>

<mosaic_0001>
module attributes {stable_mosaic.version = 11 : i64} {
  func.func @_add_margin_kernel(%arg0: i32, %arg1: i32, %arg2: memref<16x128xf32, #tpu.memory_space<vmem>>, %arg3: memref<128x128xf32, #tpu.memory_space<vmem>>, %arg4: memref<16x1xi32, #tpu.memory_space<vmem>>, %arg5: memref<16x128xf32, #tpu.memory_space<vmem>>) attributes {dimension_semantics = [#tpu.dimension_semantics<parallel>, #tpu.dimension_semantics<parallel>], iteration_bounds = array<i64: 1, 1>, scalar_prefetch = 0 : i64, scratch_operands = 0 : i64, tpu.core_type = #tpu.core_type<tc>, window_params = [{transform_indices = @transform_0, window_bounds = array<i64: 16, 128>}, {transform_indices = @transform_1, window_bounds = array<i64: 128, 128>}, {transform_indices = @transform_2, window_bounds = array<i64: 16, 1>}, {transform_indices = @transform_3, window_bounds = array<i64: 16, 128>}]} {
    %c0 = arith.constant 0 : index
    %c0_0 = arith.constant 0 : index
    %0 = vector.load %arg2[%c0, %c0_0] : memref<16x128xf32, #tpu.memory_space<vmem>>, vector<16x128xf32>
    %c0_1 = arith.constant 0 : index
    %c0_2 = arith.constant 0 : index
    %1 = vector.load %arg3[%c0_1, %c0_2] : memref<128x128xf32, #tpu.memory_space<vmem>>, vector<128x128xf32>
    %2 = arith.truncf %0 : vector<16x128xf32> to vector<16x128xbf16>
    %3 = arith.truncf %1 : vector<128x128xf32> to vector<128x128xbf16>
    %cst = arith.constant dense<0.000000e+00> : vector<16x128xf32>
    %4 = tpu.matmul %2, %3, %cst {dimension_numbers = #tpu.dot_dimension_numbers<[1], [1], [0], [0], [0, 0, 1, 0], [], []>} : vector<16x128xbf16>, vector<128x128xbf16>, vector<16x128xf32> -> vector<16x128xf32>
    %5 = arith.mulf %0, %0 : vector<16x128xf32>
    %cst_3 = arith.constant dense<0.000000e+00> : vector<16xf32>
    %6 = vector.multi_reduction <add>, %5, %cst_3 [1] : vector<16x128xf32> to vector<16xf32>
    %7 = vector.shape_cast %6 : vector<16xf32> to vector<16x1xf32>
    %cst_4 = arith.constant 1.000000e-24 : f32
    %8 = vector.broadcast %cst_4 : f32 to vector<16x1xf32>
    %9 = arith.maximumf %7, %8 : vector<16x1xf32>
    %10 = math.rsqrt %9 : vector<16x1xf32>
    %11 = arith.mulf %1, %1 : vector<128x128xf32>
    %cst_5 = arith.constant dense<0.000000e+00> : vector<128xf32>
    %12 = vector.multi_reduction <add>, %11, %cst_5 [1] : vector<128x128xf32> to vector<128xf32>
    %13 = vector.shape_cast %12 : vector<128xf32> to vector<128x1xf32>
    %cst_6 = arith.constant 1.000000e-24 : f32
    %14 = vector.broadcast %cst_6 : f32 to vector<128x1xf32>
    %15 = arith.maximumf %13, %14 : vector<128x1xf32>
    %16 = math.rsqrt %15 : vector<128x1xf32>
    %cst_7 = arith.constant 3.000000e+01 : f32
    %17 = vector.broadcast %cst_7 : f32 to vector<16x1xf32>
    %18 = arith.mulf %17, %10 : vector<16x1xf32>
    %19 = vector.broadcast %18 : vector<16x1xf32> to vector<16x128xf32>
    %20 = arith.mulf %4, %19 : vector<16x128xf32>
    %21 = vector.shape_cast %16 : vector<128x1xf32> to vector<1x128xf32>
    %22 = vector.broadcast %21 : vector<1x128xf32> to vector<16x128xf32>
    %23 = arith.mulf %20, %22 : vector<16x128xf32>
    %c128_i32 = arith.constant 128 : i32
    %24 = arith.muli %arg0, %c128_i32 : i32
    %25 = tpu.iota {dimensions = array<i32: 1>} : vector<16x128xi32>
    %c0_8 = arith.constant 0 : index
    %c0_9 = arith.constant 0 : index
    %26 = vector.load %arg4[%c0_8, %c0_9] : memref<16x1xi32, #tpu.memory_space<vmem>>, vector<16x1xi32>
    %27 = vector.broadcast %24 : i32 to vector<16x1xi32>
    %28 = arith.subi %26, %27 : vector<16x1xi32>
    %29 = vector.broadcast %28 : vector<16x1xi32> to vector<16x128xi32>
    %30 = arith.cmpi eq, %25, %29 : vector<16x128xi32>
    %cst_10 = arith.constant 1.200000e+01 : f32
    %31 = vector.broadcast %cst_10 : f32 to vector<16x128xf32>
    %32 = arith.subf %23, %31 : vector<16x128xf32>
    %33 = arith.select %30, %32, %23 : vector<16x128xi1>, vector<16x128xf32>
    %c0_11 = arith.constant 0 : index
    %c0_12 = arith.constant 0 : index
    %34 = vector.load %arg5[%c0_11, %c0_12] : memref<16x128xf32, #tpu.memory_space<vmem>>, vector<16x128xf32>
    tpu.vector_store %arg5[%c0_11, %c0_12], %33 {strides = array<i32>} : memref<16x128xf32, #tpu.memory_space<vmem>>, vector<16x128xf32>,
    return
  }
  func.func @transform_0(%arg0: i32, %arg1: i32) -> (i32, i32) {
    %c0_i32 = arith.constant 0 : i32
    %c0_i32_0 = arith.constant 0 : i32
    return %arg1, %c0_i32 : i32, i32
  }
  func.func @transform_1(%arg0: i32, %arg1: i32) -> (i32, i32) {
    %c0_i32 = arith.constant 0 : i32
    %c0_i32_0 = arith.constant 0 : i32
    return %arg0, %c0_i32 : i32, i32
  }
  func.func @transform_2(%arg0: i32, %arg1: i32) -> (i32, i32) {
    %c0_i32 = arith.constant 0 : i32
    %c0_i32_0 = arith.constant 0 : i32
    return %arg1, %c0_i32 : i32, i32
  }
  func.func @transform_3(%arg0: i32, %arg1: i32) -> (i32, i32) {
    %c0_i32 = arith.constant 0 : i32
    return %arg1, %arg0 : i32, i32
  }
}

</mosaic_0001>

<llo_original>
// kernel: tpu_custom_call.1
$region0: #{tpu_custom_call.1}
  #allocation0 [shape = 'u32[]', space=smem, size = 0x4, offset = 0x4, fixed_abs, tag = 'smem constant byte address 0x4 - core index']
  #allocation1 [shape = 'u32[144,128]{1,0:T(1,128)}', space=vmem, size = 0x12000, scoped, tag = 'internal scratch']
  %s0 = inlined_call_operand.vmem [shape: f32[16,128], index: 0, kind: input, shape index: {}]
  %s1 = inlined_call_operand.hbm [shape: f32[128,128], index: 1, kind: input, shape index: {}]
  %s2 = inlined_call_operand.vmem [shape: s32[16,1], index: 2, kind: input, shape index: {}]
  %s3 = inlined_call_operand.hbm [shape: f32[16,128], index: 3, kind: output, shape index: {}]
  %s4 = sld [smem:[#allocation0]]
  $region26: #{tpu_custom_call.1} parent=0
    _
  %s6 = ssub.s32 1, %s4
  %s7 = scalar_select 0, %s6, %s4
  $region1: #{tpu_custom_call.1} parent=0
    #allocation2 [shape = 'u8[65536]{0}', space=vmem, size = 0x10000, scoped, tag = 'input window, operand 1, single buffered']
    #allocation3 [shape = 's32[1]{0}', space=sflag, size = 0x4, scoped, tag = 'scoped memory for tpu_custom_call.1']
    #allocation4 [shape = 's32[1]{0}', space=sflag, size = 0x4, scoped, tag = 'scoped memory for tpu_custom_call.1']
    #allocation5 [shape = 'u8[8192]{0}', space=vmem, size = 0x2000, scoped, tag = 'output window, operand 0, single buffered']
    %8 = vsyncpa [#allocation3], 0
    %9 = vsyncpa [#allocation4], 0
    // Predicated region
    $region2: #{tpu_custom_call.1} parent=1 // pred_check
      _
    $region3: #{tpu_custom_call.1} parent=1 // pred_check_branch
      %11 = sbr.rel (0) target = $region5
    $region4: #{tpu_custom_call.1} parent=1 // pred_region
      _
    $region5: #{tpu_custom_call.1} parent=1 // pred_fallthru
      _
    // Predicated region
    $region6: #{tpu_custom_call.1} parent=1 // pred_check
      _
    $region7: #{tpu_custom_call.1} parent=1 // pred_check_branch
      %13 = sbr.rel (0) target = $region9
    $region8: #{tpu_custom_call.1} parent=1 // pred_region
      %s15 = ssub.s32 2048, 2048
      %16 = vsyncadd [#allocation3], %s15
      %s17 = sshll.u32 [#allocation2], 4
      %s18 = int_to_ptr.vmem [resolvable:$true] %s17
      %23 = dma.hbm_to_vmem [thread:$0]  %s1, 2048, %s18, [#allocation3], 128, 128, 8
    $region9: #{tpu_custom_call.1} parent=1 // pred_fallthru
      _
    // Predicated region
    $region10: #{tpu_custom_call.1} parent=1 // pred_check
      _
    $region11: #{tpu_custom_call.1} parent=1 // pred_check_branch
      %25 = sbr.rel (0) target = $region13
    $region12: #{tpu_custom_call.1} parent=1 // pred_region
      _
    $region13: #{tpu_custom_call.1} parent=1 // pred_fallthru
      _
    // Predicated region
    $region14: #{tpu_custom_call.1} parent=1 // pred_check
      _
    $region15: #{tpu_custom_call.1} parent=1 // pred_check_branch
      %27 = sbr.rel (0) target = $region17
    $region16: #{tpu_custom_call.1} parent=1 // pred_region
      %28 = dma.done [#allocation3], 2048
    $region17: #{tpu_custom_call.1} parent=1 // pred_fallthru
      _
    %v30 = vld [vmem:[%s0] sm:$0xff]
    %v31 = vld [vmem:[%s0 + $0x8] sm:$0xff]
    %v32 = vld [vmem:[#allocation2] sm:$0xff]
    %v33 = vld [vmem:[#allocation2 + $0x8] sm:$0xff]
    %v34 = vld [vmem:[#allocation2 + $0x10] sm:$0xff]
    %v35 = vld [vmem:[#allocation2 + $0x18] sm:$0xff]
    %v36 = vld [vmem:[#allocation2 + $0x20] sm:$0xff]
    %v37 = vld [vmem:[#allocation2 + $0x28] sm:$0xff]
    %v38 = vld [vmem:[#allocation2 + $0x30] sm:$0xff]
    %v39 = vld [vmem:[#allocation2 + $0x38] sm:$0xff]
    %v40 = vld [vmem:[#allocation2 + $0x40] sm:$0xff]
    %v41 = vld [vmem:[#allocation2 + $0x48] sm:$0xff]
    %v42 = vld [vmem:[#allocation2 + $0x50] sm:$0xff]
    %v43 = vld [vmem:[#allocation2 + $0x58] sm:$0xff]
    %v44 = vld [vmem:[#allocation2 + $0x60] sm:$0xff]
    %v45 = vld [vmem:[#allocation2 + $0x68] sm:$0xff]
    %v46 = vld [vmem:[#allocation2 + $0x70] sm:$0xff]
    %v47 = vld [vmem:[#allocation2 + $0x78] sm:$0xff]
    %v48 = vpack.c.bf16 %v31, %v30
    %v49 = vpack.c.bf16 %v33, %v32
    %v50 = vpack.c.bf16 %v35, %v34
    %v51 = vpack.c.bf16 %v37, %v36
    %v52 = vpack.c.bf16 %v39, %v38
    %v53 = vpack.c.bf16 %v41, %v40
    %v54 = vpack.c.bf16 %v43, %v42
    %v55 = vpack.c.bf16 %v45, %v44
    %v56 = vpack.c.bf16 %v47, %v46
    %57 = vmatprep.subr.bf16.mxu0 0
    %58 = vmatpush1.bf16.xpose.msra.mxu0 %v56
    %59 = vmatprep.subr.bf16.mxu0 0
    %60 = vmatpush1.bf16.xpose.msra.mxu0 %v55
    %61 = vmatprep.subr.bf16.mxu0 0
    %62 = vmatpush1.bf16.xpose.msra.mxu0 %v54
    %63 = vmatprep.subr.bf16.mxu0 0
    %64 = vmatpush1.bf16.xpose.msra.mxu0 %v53
    %65 = vmatprep.subr.bf16.mxu0 0
    %66 = vmatpush1.bf16.xpose.msra.mxu0 %v52
    %67 = vmatprep.subr.bf16.mxu0 0
    %68 = vmatpush1.bf16.xpose.msra.mxu0 %v51
    %69 = vmatprep.subr.bf16.mxu0 0
    %70 = vmatpush1.bf16.xpose.msra.mxu0 %v50
    %71 = vmatprep.subr.bf16.mxu0 0
    %72 = vmatpush1.bf16.xpose.msra.mxu0 %v49
    %73 = vmatprep.subr.bf16.mxu0 0
    %74 = vmatpush2.bf16.xpose.msra.mxu0 0
    %75 = vmatprep.subr.bf16.mxu0 0
    %76 = vmatpush2.bf16.xpose.msra.mxu0 0
    %77 = vmatprep.subr.bf16.mxu0 0
    %78 = vmatpush2.bf16.xpose.msra.mxu0 0
    %79 = vmatprep.subr.bf16.mxu0 0
    %80 = vmatpush2.bf16.xpose.msra.mxu0 0
    %81 = vmatprep.subr.bf16.mxu0 0
    %82 = vmatpush2.bf16.xpose.msra.mxu0 0
    %83 = vmatprep.subr.bf16.mxu0 0
    %84 = vmatpush2.bf16.xpose.msra.mxu0 0
    %85 = vmatprep.subr.bf16.mxu0 0
    %86 = vmatpush2.bf16.xpose.msra.mxu0 0
    %87 = vmatprep.subr.bf16.mxu0 0
    %88 = vmatpush2.bf16.xpose.msra.mxu0 0
    %89 = vmatprep.mubr.bf16.mxu0 0
    %90 = vmatmul.mubr.bf16.gmra.mxu0 %v48
    %v91 = vpop.f32.mrf.mxu0
    %v92 = vadd.f32 0.0, %v91
    %v93 = vpop.f32.mrf.mxu0
    %v94 = vpop.f32.mrf.mxu0
    %v95 = vadd.f32 0.0, %v94
    %v96 = vpop.f32.mrf.mxu0
    %97 = vdwg.mxu0
    %v98 = vmul.f32 %v30, %v30
    %v99 = vmul.f32 %v31, %v31
    %100 = vadd.xlane.f32.xlu0 %v98
    %v101 = vpop.xlane.xlu0 %100
    %102 = vadd.xlane.f32.xlu0 %v99
    %v103 = vpop.xlane.xlu0 %102
    %v104 = vmax.f32 %v101, 1e-24
    %v105 = vmax.f32 %v103, 1e-24
    %v106 = vrsqrt.pop %v104
    %v107 = vrsqrt.pop %v105
    %v108 = vmul.f32 %v32, %v32
    %v109 = vmul.f32 %v33, %v33
    %v110 = vmul.f32 %v34, %v34
    %v111 = vmul.f32 %v35, %v35
    %v112 = vmul.f32 %v36, %v36
    %v113 = vmul.f32 %v37, %v37
    %v114 = vmul.f32 %v38, %v38
    %v115 = vmul.f32 %v39, %v39
    %v116 = vmul.f32 %v40, %v40
    %v117 = vmul.f32 %v41, %v41
    %v118 = vmul.f32 %v42, %v42
    %v119 = vmul.f32 %v43, %v43
    %v120 = vmul.f32 %v44, %v44
    %v121 = vmul.f32 %v45, %v45
    %v122 = vmul.f32 %v46, %v46
    %v123 = vmul.f32 %v47, %v47
    %124 = vadd.xlane.f32.xlu0 %v108
    %v125 = vpop.xlane.xlu0 %124
    %126 = vadd.xlane.f32.xlu0 %v109
    %v127 = vpop.xlane.xlu0 %126
    %128 = vadd.xlane.f32.xlu0 %v110
    %v129 = vpop.xlane.xlu0 %128
    %130 = vadd.xlane.f32.xlu0 %v111
    %v131 = vpop.xlane.xlu0 %130
    %132 = vadd.xlane.f32.xlu0 %v112
    %v133 = vpop.xlane.xlu0 %132
    %134 = vadd.xlane.f32.xlu0 %v113
    %v135 = vpop.xlane.xlu0 %134
    %136 = vadd.xlane.f32.xlu0 %v114
    %v137 = vpop.xlane.xlu0 %136
    %138 = vadd.xlane.f32.xlu0 %v115
    %v139 = vpop.xlane.xlu0 %138
    %140 = vadd.xlane.f32.xlu0 %v116
    %v141 = vpop.xlane.xlu0 %140
    %142 = vadd.xlane.f32.xlu0 %v117
    %v143 = vpop.xlane.xlu0 %142
    %144 = vadd.xlane.f32.xlu0 %v118
    %v145 = vpop.xlane.xlu0 %144
    %146 = vadd.xlane.f32.xlu0 %v119
    %v147 = vpop.xlane.xlu0 %146
    %148 = vadd.xlane.f32.xlu0 %v120
    %v149 = vpop.xlane.xlu0 %148
    %150 = vadd.xlane.f32.xlu0 %v121
    %v151 = vpop.xlane.xlu0 %150
    %152 = vadd.xlane.f32.xlu0 %v122
    %v153 = vpop.xlane.xlu0 %152
    %154 = vadd.xlane.f32.xlu0 %v123
    %v155 = vpop.xlane.xlu0 %154
    %v156 = vmax.f32 %v125, 1e-24
    %v157 = vmax.f32 %v127, 1e-24
    %v158 = vmax.f32 %v129, 1e-24
    %v159 = vmax.f32 %v131, 1e-24
    %v160 = vmax.f32 %v133, 1e-24
    %v161 = vmax.f32 %v135, 1e-24
    %v162 = vmax.f32 %v137, 1e-24
    %v163 = vmax.f32 %v139, 1e-24
    %v164 = vmax.f32 %v141, 1e-24
    %v165 = vmax.f32 %v143, 1e-24
    %v166 = vmax.f32 %v145, 1e-24
    %v167 = vmax.f32 %v147, 1e-24
    %v168 = vmax.f32 %v149, 1e-24
    %v169 = vmax.f32 %v151, 1e-24
    %v170 = vmax.f32 %v153, 1e-24
    %v171 = vmax.f32 %v155, 1e-24
    %v172 = vrsqrt.pop %v156
    %v173 = vrsqrt.pop %v157
    %v174 = vrsqrt.pop %v158
    %v175 = vrsqrt.pop %v159
    %v176 = vrsqrt.pop %v160
    %v177 = vrsqrt.pop %v161
    %v178 = vrsqrt.pop %v162
    %v179 = vrsqrt.pop %v163
    %v180 = vrsqrt.pop %v164
    %v181 = vrsqrt.pop %v165
    %v182 = vrsqrt.pop %v166
    %v183 = vrsqrt.pop %v167
    %v184 = vrsqrt.pop %v168
    %v185 = vrsqrt.pop %v169
    %v186 = vrsqrt.pop %v170
    %v187 = vrsqrt.pop %v171
    %v188 = vmul.f32 %v106, 30.0
    %v189 = vmul.f32 %v107, 30.0
    %v190 = vmul.f32 %v92, %v188
    %v191 = vmul.f32 %v95, %v189
    %v208 = vlaneseq
    %v209 = vand.u32 %v208, 127
    %v210 = vlaneseq
    %v211 = vshrl.u32 %v210, 7
    %v212 = vsub.s32 %v209, %v211
    %v213 = vrot.slane %v172, %v212
    %v214 = vadd.s32 %v209, 4294967288
    %v215 = vlaneseq
    %v216 = vshrl.u32 %v215, 7
    %v217 = vsub.s32 %v214, %v216
    %v218 = vrot.slane %v173, %v217
    %vm219 = vcmask 130112
    %v220 = vsel %vm219, %v218, %v213
    %v221 = vadd.s32 %v209, 4294967280
    %v222 = vlaneseq
    %v223 = vshrl.u32 %v222, 7
    %v224 = vsub.s32 %v221, %v223
    %v225 = vrot.slane %v174, %v224
    %vm226 = vcmask 195712
    %v227 = vsel %vm226, %v225, %v220
    %v228 = vadd.s32 %v209, 4294967272
    %v229 = vlaneseq
    %v230 = vshrl.u32 %v229, 7
    %v231 = vsub.s32 %v228, %v230
    %v232 = vrot.slane %v175, %v231
    %vm233 = vcmask 261312
    %v234 = vsel %vm233, %v232, %v227
    %v235 = vadd.s32 %v209, 4294967264
    %v236 = vlaneseq
    %v237 = vshrl.u32 %v236, 7
    %v238 = vsub.s32 %v235, %v237
    %v239 = vrot.slane %v176, %v238
    %vm240 = vcmask 326912
    %v241 = vsel %vm240, %v239, %v234
    %v242 = vadd.s32 %v209, 4294967256
    %v243 = vlaneseq
    %v244 = vshrl.u32 %v243, 7
    %v245 = vsub.s32 %v242, %v244
    %v246 = vrot.slane %v177, %v245
    %vm247 = vcmask 392512
    %v248 = vsel %vm247, %v246, %v241
    %v249 = vadd.s32 %v209, 4294967248
    %v250 = vlaneseq
    %v251 = vshrl.u32 %v250, 7
    %v252 = vsub.s32 %v249, %v251
    %v253 = vrot.slane %v178, %v252
    %vm254 = vcmask 458112
    %v255 = vsel %vm254, %v253, %v248
    %v256 = vadd.s32 %v209, 4294967240
    %v257 = vlaneseq
    %v258 = vshrl.u32 %v257, 7
    %v259 = vsub.s32 %v256, %v258
    %v260 = vrot.slane %v179, %v259
    %vm261 = vcmask 523712
    %v262 = vsel %vm261, %v260, %v255
    %v263 = vadd.s32 %v209, 4294967232
    %v264 = vlaneseq
    %v265 = vshrl.u32 %v264, 7
    %v266 = vsub.s32 %v263, %v265
    %v267 = vrot.slane %v180, %v266
    %vm268 = vcmask 589312
    %v269 = vsel %vm268, %v267, %v262
    %v270 = vadd.s32 %v209, 4294967224
    %v271 = vlaneseq
    %v272 = vshrl.u32 %v271, 7
    %v273 = vsub.s32 %v270, %v272
    %v274 = vrot.slane %v181, %v273
    %vm275 = vcmask 654912
    %v276 = vsel %vm275, %v274, %v269
    %v277 = vadd.s32 %v209, 4294967216
    %v278 = vlaneseq
    %v279 = vshrl.u32 %v278, 7
    %v280 = vsub.s32 %v277, %v279
    %v281 = vrot.slane %v182, %v280
    %vm282 = vcmask 720512
    %v283 = vsel %vm282, %v281, %v276
    %v284 = vadd.s32 %v209, 4294967208
    %v285 = vlaneseq
    %v286 = vshrl.u32 %v285, 7
    %v287 = vsub.s32 %v284, %v286
    %v288 = vrot.slane %v183, %v287
    %vm289 = vcmask 786112
    %v290 = vsel %vm289, %v288, %v283
    %v291 = vadd.s32 %v209, 4294967200
    %v292 = vlaneseq
    %v293 = vshrl.u32 %v292, 7
    %v294 = vsub.s32 %v291, %v293
    %v295 = vrot.slane %v184, %v294
    %vm296 = vcmask 851712
    %v297 = vsel %vm296, %v295, %v290
    %v298 = vadd.s32 %v209, 4294967192
    %v299 = vlaneseq
    %v300 = vshrl.u32 %v299, 7
    %v301 = vsub.s32 %v298, %v300
    %v302 = vrot.slane %v185, %v301
    %vm303 = vcmask 917312
    %v304 = vsel %vm303, %v302, %v297
    %v305 = vadd.s32 %v209, 4294967184
    %v306 = vlaneseq
    %v307 = vshrl.u32 %v306, 7
    %v308 = vsub.s32 %v305, %v307
    %v309 = vrot.slane %v186, %v308
    %vm310 = vcmask 982912
    %v311 = vsel %vm310, %v309, %v304
    %v312 = vadd.s32 %v209, 4294967176
    %v313 = vlaneseq
    %v314 = vshrl.u32 %v313, 7
    %v315 = vsub.s32 %v312, %v314
    %v316 = vrot.slane %v187, %v315
    %vm317 = vcmask 1048512
    %v318 = vsel %vm317, %v316, %v311
    %vm319 = vcmask 1042434
    %v320 = vsel %vm319, %v318, %v318
    %vm321 = vcmask 1043459
    %v322 = vsel %vm321, %v318, %v320
    %vm323 = vcmask 1044484
    %v324 = vsel %vm323, %v318, %v322
    %vm325 = vcmask 1045509
    %v326 = vsel %vm325, %v318, %v324
    %vm327 = vcmask 1046534
    %v328 = vsel %vm327, %v318, %v326
    %vm329 = vcmask 1047559
    %v330 = vsel %vm329, %v318, %v328
    %v332 = vmul.f32 %v190, %v330
    %v333 = vmul.f32 %v191, %v330
    %s334 = smul.u32 0, 128
    %v335 = vld [vmem:[%s2] sm:$0xff]
    %v336 = vld [vmem:[%s2 + $0x8] sm:$0xff]
    %v337 = vstv %s334
    %v338 = vsub.s32 %v335, %v337
    %v339 = vsub.s32 %v336, %v337
    %340 = vset.pattern.permute.xlu0 0
    %341 = vperm.xlu0 %340, %v338
    %v342 = vpop.permute.xlu0 %341
    %343 = vset.pattern.permute.xlu0 0
    %344 = vperm.xlu0 %343, %v339
    %v345 = vpop.permute.xlu0 %344
    %vm346 = vcmp.eq.s32.totalorder %v209, %v342
    %vm347 = vcmp.eq.s32.totalorder %v209, %v345
    %v348 = vsub.f32 %v332, 12.0
    %v349 = vsub.f32 %v333, 12.0
    %v350 = vsel %vm346, %v348, %v332
    %v351 = vsel %vm347, %v349, %v333
    %352 = vst [vmem:[#allocation5] sm:$0xff] %v350
    %353 = vst [vmem:[#allocation5 + $0x8] sm:$0xff] %v351
    // Predicated region
    $region18: #{tpu_custom_call.1} parent=1 // pred_check
      _
    $region19: #{tpu_custom_call.1} parent=1 // pred_check_branch
      %355 = sbr.rel (0) target = $region21
    $region20: #{tpu_custom_call.1} parent=1 // pred_region
      %s357 = ssub.s32 256, 256
      %358 = vsyncadd [#allocation4], %s357
      %s359 = sshll.u32 [#allocation5], 4
      %s360 = int_to_ptr.vmem [resolvable:$true] %s359
      %365 = dma.vmem_to_hbm [thread:$0]  %s360, 256, %s3, [#allocation4], 128, 128, 8
    $region21: #{tpu_custom_call.1} parent=1 // pred_fallthru
      _
    // Predicated region
    $region22: #{tpu_custom_call.1} parent=1 // pred_check
      _
    $region23: #{tpu_custom_call.1} parent=1 // pred_check_branch
      %367 = sbr.rel (0) target = $region25
    $region24: #{tpu_custom_call.1} parent=1 // pred_region
      %368 = dma.done [#allocation4], 256
    $region25: #{tpu_custom_call.1} parent=1 // pred_fallthru
      _
    %369 = vsyncpa [#allocation3], 1
    %370 = vsyncpa [#allocation4], 1

</llo_original>
